<compile_context>
chip_gen: v7x
topology: tpu7x:2x2x1
jax: 0.10.0
libtpu: 0.0.40
codegen_flags: <defaults>
</compile_context>

<pallas_src>
import functools
import math

import numpy as np
import jax
import jax.numpy as jnp
from jax import lax
from jax.experimental import pallas as pl
from jax.experimental.pallas import tpu as pltpu

GAMMA = 2          # focal exponent (== 2 -> plain square, no pow)
ALPHA = 0.25       # -> alpha vector [0.25, 0.75]
FILTER_SIZE = 5    # 5x5 binomial "neighbor" filter (loss_filter_size=5)
# separable 1-D binomial taps; all exact binary fractions (outer product == 5x5 filter / 256)
_K1D = (1.0 / 16, 4.0 / 16, 6.0 / 16, 4.0 / 16, 1.0 / 16)


def _focal_kernel(preds_ref, target_ref, out_ref, *, img_w, img_h, n_valid, lane_tile):
    """One grid step over a (C=2, Hp, Lt) lane-packed slab of images.

    Lt lanes hold whole images of width `img_w` back to back (block starts are
    image-aligned), so the per-image zero-padding of the 5x5 blur is enforced
    with lane/row masks.  Padded rows/lanes are masked out of the loss sum.
    """
    Hp = preds_ref.shape[1]
    Lt = preds_ref.shape[2]

    p0 = preds_ref[0].astype(jnp.float32)        # (Hp, Lt) prediction logit, class 0
    p1 = preds_ref[1].astype(jnp.float32)        # class 1
    t0 = target_ref[0].astype(jnp.float32)
    t1 = target_ref[1].astype(jnp.float32)

    # target = argmax(softmax(target, dim=1)) == argmax(target); ties -> class 0 (torch.argmax)
    is_cls1 = t1 > t0
    pt = jnp.where(is_cls1, p1, p0)              # logit of the selected class
    p_other = jnp.where(is_cls1, p0, p1)         # logit of the other class

    row = lax.broadcasted_iota(jnp.int32, (Hp, 1), 0)
    lane = lax.broadcasted_iota(jnp.int32, (1, Lt), 1) + pl.program_id(0) * lane_tile
    col = lane % img_w                           # within-image column of each lane

    # ---- separable 5x5 binomial blur, zero padded, via XLU rolls ----------------
    # row (sublane) direction: rowblur[h] = sum_oy k[oy+2] * pt[h+oy], zero outside image
    rowblur = jnp.float32(_K1D[2]) * pt
    for oy in (-2, -1, 1, 2):
        wy = jnp.where((row + oy >= 0) & (row + oy < img_h),
                       jnp.float32(_K1D[oy + 2]), jnp.float32(0.0))
        rowblur = rowblur + wy * pltpu.roll(pt, shift=(-oy) % Hp, axis=0)

    # column (lane) direction: masks also stop leakage across packed-image boundaries
    conv = jnp.float32(_K1D[2]) * rowblur
    for ox in (-2, -1, 1, 2):
        wx = jnp.where((col + ox >= 0) & (col + ox < img_w),
                       jnp.float32(_K1D[ox + 2]), jnp.float32(0.0))
        conv = conv + wx * pltpu.roll(rowblur, shift=(-ox) % Lt, axis=1)

    # ---- focal weighting --------------------------------------------------------
    # log_softmax gathered at the target class: logpt = -softplus(p_other - p_sel)
    d = p_other - pt
    logpt = -(jnp.maximum(d, 0.0) + jnp.log(1.0 + jnp.exp(-jnp.abs(d))))
    at = jnp.where(is_cls1, jnp.float32(1.0 - ALPHA), jnp.float32(ALPHA))
    om = 1.0 - conv
    loss = -(om * om) * (logpt * at)             # gamma == 2

    valid = (row < img_h) & (lane < n_valid)     # drop padded rows / padded lanes
    loss = jnp.where(valid, loss, jnp.float32(0.0))

    # per-step partial sum, broadcast into a lane-dense (1, 1, 128) output block
    out_ref[...] = jnp.full(out_ref.shape, jnp.sum(loss), jnp.float32)


def _lane_tile(Lp, W, Hp, C, itemsize,
               vmem_budget_bytes=16 << 20, min_split_bytes=4 << 20):
    """Lane-tile size: whole images wide, 128-lane aligned, VMEM-budgeted.

    2 inputs x 2 pipeline buffers of (C, Hp, lt) must fit the budget; blocks must
    start on image boundaries (lt % W == 0) so the in-kernel column masks are valid.
    """
    per_lane = C * Hp * itemsize                  # bytes per lane column, one input
    total = per_lane * Lp
    base = (W * 128) // math.gcd(W, 128)          # lcm(W, 128)
    if total <= min_split_bytes or Lp % base != 0 or Lp <= base:
        # TODO(synk): for huge inputs whose W does not align with 128 lanes, pad N*W
        # up to a multiple of lcm(W, 128) so the lane axis can still be tiled.
        return Lp                                 # single grid step
    max_lt = vmem_budget_bytes // (4 * per_lane)  # 2 inputs x double buffering
    max_lt = max(base, min(max_lt, Lp // 2))      # prefer >= 2 steps once splitting
    lt = base
    while lt * 2 <= max_lt and Lp % (lt * 2) == 0:
        lt *= 2
    return lt


def neighbor_focal_loss(preds, target, *, size_average=True):
    """Pallas TPU implementation of NeighborFocalLoss.forward
    (gamma=2, alpha=0.25, loss_filter_size=5).  preds/target layout: NCHW with C == 2."""
    N, C, H, W = preds.shape
    assert C == 2 and target.shape == preds.shape

    # Lane-pack the batch: (N, C, H, W) -> (C, H, N*W), then pad to (C, Hp, Lp)
    # with Hp % 8 == 0 and Lp % 128 == 0 so every vreg is fully populated.
    L = N * W
    Hp = -(-H // 8) * 8
    Lp = -(-L // 128) * 128

    def pack(x):
        x = jnp.transpose(x, (1, 2, 0, 3)).reshape(C, H, L)
        if (Hp, Lp) != (H, L):
            x = jnp.pad(x, ((0, 0), (0, Hp - H), (0, Lp - L)))
        return x

    preds_p, target_p = pack(preds), pack(target)

    itemsize = jnp.dtype(preds.dtype).itemsize
    lt = _lane_tile(Lp, W, Hp, C, itemsize)
    grid = Lp // lt

    elems = N * H * W
    cost = pl.CostEstimate(
        flops=40 * elems,                         # selects + 10 blur madds + focal math
        transcendentals=2 * elems,                # one exp + one log per pixel
        bytes_accessed=2 * C * Hp * Lp * itemsize + grid * 128 * 4)

    kernel = functools.partial(_focal_kernel, img_w=W, img_h=H,
                               n_valid=L, lane_tile=lt)

    partials = pl.pallas_call(
        kernel,
        out_shape=jax.ShapeDtypeStruct((grid, 1, 128), jnp.float32),
        grid_spec=pltpu.PrefetchScalarGridSpec(
            num_scalar_prefetch=0,
            grid=(grid,),
            in_specs=[
                pl.BlockSpec((C, Hp, lt), lambda i: (0, 0, i)),   # preds slab
                pl.BlockSpec((C, Hp, lt), lambda i: (0, 0, i)),   # target slab
            ],
            out_specs=pl.BlockSpec((1, 1, 128), lambda i: (i, 0, 0)),
        ),
        compiler_params=pltpu.CompilerParams(
            dimension_semantics=("parallel",)),   # independent partial sums per step
        cost_estimate=cost,
    )(preds_p, target_p)

    total = jnp.sum(partials[:, 0, 0])
    return total / elems if size_average else total


def _binomial_1d(size):
    if size == 3:
        v = np.array([1.0, 2.0, 1.0])
    else:
        v = np.array([1.0, 4.0, 6.0, 4.0, 1.0])
    return (v / v.sum()).astype(np.float32)


def _reference(preds, target, *, size_average=True):
    """Pure-JAX reference mirroring the PyTorch forward (for correctness check)."""
    N, C, H, W = preds.shape
    t = jnp.argmax(jax.nn.softmax(target, axis=1), axis=1)            # (N, H, W)
    pt = jnp.where(t == 1, preds[:, 1], preds[:, 0])                  # (N, H, W)
    k1d = _binomial_1d(FILTER_SIZE).astype(np.float64)
    filt = np.outer(k1d, k1d)
    r = FILTER_SIZE // 2
    padded = jnp.pad(pt, ((0, 0), (r, r), (r, r)))
    conv = jnp.zeros_like(pt)
    for dy in range(FILTER_SIZE):
        for dx in range(FILTER_SIZE):
            conv = conv + float(filt[dy, dx]) * padded[:, dy:dy + H, dx:dx + W]
    preds_rows = jnp.transpose(preds, (0, 2, 3, 1)).reshape(-1, C)    # nchw2nhwc
    logp = jax.nn.log_softmax(preds_rows, axis=1)
    tf = t.reshape(-1)
    logpt = jnp.take_along_axis(logp, tf[:, None], axis=1)[:, 0]
    at = jnp.where(tf == 1, 1.0 - ALPHA, ALPHA)
    loss = -1.0 * (1.0 - conv.reshape(-1)) ** GAMMA * (logpt * at)
    return loss.mean() if size_average else loss.sum()


if __name__ == "__main__":
    key = jax.random.PRNGKey(0)
    k1, k2 = jax.random.split(key)
    N, C, H, W = 2, 2, 16, 16
    preds = jax.random.normal(k1, (N, C, H, W), dtype=jnp.float32)
    target = jax.random.normal(k2, (N, C, H, W), dtype=jnp.float32)

    out = neighbor_focal_loss(preds, target)
    out = jax.block_until_ready(out)

    ref = _reference(preds, target)
    np.testing.assert_allclose(np.asarray(out), np.asarray(ref), rtol=1e-5, atol=1e-6)
    print("KERNEL_OK")
</pallas_src>

<mosaic_0001>
module attributes {stable_mosaic.version = 11 : i64} {
  func.func @_focal_kernel(%arg0: i32, %arg1: memref<2x16x128xf32, #tpu.memory_space<vmem>>, %arg2: memref<2x16x128xf32, #tpu.memory_space<vmem>>, %arg3: memref<1x1x128xf32, #tpu.memory_space<vmem>>) attributes {dimension_semantics = [#tpu.dimension_semantics<parallel>], iteration_bounds = array<i64: 1>, scalar_prefetch = 0 : i64, scratch_operands = 0 : i64, tpu.core_type = #tpu.core_type<tc>, window_params = [{transform_indices = @transform_0, window_bounds = array<i64: 2, 16, 128>}, {transform_indices = @transform_1, window_bounds = array<i64: 2, 16, 128>}, {transform_indices = @transform_2, window_bounds = array<i64: 1, 1, 128>}]} {
    %c0 = arith.constant 0 : index
    %c0_0 = arith.constant 0 : index
    %c0_1 = arith.constant 0 : index
    %0 = vector.load %arg1[%c0, %c0_0, %c0_1] : memref<2x16x128xf32, #tpu.memory_space<vmem>>, vector<1x16x128xf32>
    %1 = vector.shape_cast %0 : vector<1x16x128xf32> to vector<16x128xf32>
    %c1 = arith.constant 1 : index
    %c0_2 = arith.constant 0 : index
    %c0_3 = arith.constant 0 : index
    %2 = vector.load %arg1[%c1, %c0_2, %c0_3] : memref<2x16x128xf32, #tpu.memory_space<vmem>>, vector<1x16x128xf32>
    %3 = vector.shape_cast %2 : vector<1x16x128xf32> to vector<16x128xf32>
    %c0_4 = arith.constant 0 : index
    %c0_5 = arith.constant 0 : index
    %c0_6 = arith.constant 0 : index
    %4 = vector.load %arg2[%c0_4, %c0_5, %c0_6] : memref<2x16x128xf32, #tpu.memory_space<vmem>>, vector<1x16x128xf32>
    %5 = vector.shape_cast %4 : vector<1x16x128xf32> to vector<16x128xf32>
    %c1_7 = arith.constant 1 : index
    %c0_8 = arith.constant 0 : index
    %c0_9 = arith.constant 0 : index
    %6 = vector.load %arg2[%c1_7, %c0_8, %c0_9] : memref<2x16x128xf32, #tpu.memory_space<vmem>>, vector<1x16x128xf32>
    %7 = vector.shape_cast %6 : vector<1x16x128xf32> to vector<16x128xf32>
    %8 = arith.cmpf ogt, %7, %5 : vector<16x128xf32>
    %9 = arith.select %8, %3, %1 : vector<16x128xi1>, vector<16x128xf32>
    %10 = arith.select %8, %1, %3 : vector<16x128xi1>, vector<16x128xf32>
    %11 = tpu.iota {dimensions = array<i32: 0>} : vector<16x1xi32>
    %12 = tpu.iota {dimensions = array<i32: 1>} : vector<1x128xi32>
    %c128_i32 = arith.constant 128 : i32
    %13 = arith.muli %arg0, %c128_i32 : i32
    %14 = vector.broadcast %13 : i32 to vector<1x128xi32>
    %15 = arith.addi %12, %14 : vector<1x128xi32>
    %c16_i32 = arith.constant 16 : i32
    %c0_i32 = arith.constant 0 : i32
    %16 = arith.cmpi eq, %c16_i32, %c0_i32 : i32
    %c1_i32 = arith.constant 1 : i32
    %17 = arith.select %16, %c1_i32, %c16_i32 : i32
    %18 = vector.broadcast %17 : i32 to vector<1x128xi32>
    %19 = arith.remsi %15, %18 : vector<1x128xi32>
    %c0_i32_10 = arith.constant 0 : i32
    %20 = vector.broadcast %c0_i32_10 : i32 to vector<1x128xi32>
    %21 = arith.cmpi ne, %19, %20 : vector<1x128xi32>
    %c0_i32_11 = arith.constant 0 : i32
    %22 = vector.broadcast %c0_i32_11 : i32 to vector<1x128xi32>
    %23 = arith.cmpi slt, %19, %22 : vector<1x128xi32>
    %c0_i32_12 = arith.constant 0 : i32
    %24 = arith.cmpi slt, %17, %c0_i32_12 : i32
    %25 = vector.broadcast %24 : i1 to vector<1x128xi1>
    %26 = vector.broadcast %25 : vector<1x128xi1> to vector<1x128xi1>
    %27 = arith.xori %23, %26 : vector<1x128xi1>
    %28 = arith.andi %27, %21 : vector<1x128xi1>
    %29 = vector.broadcast %17 : i32 to vector<1x128xi32>
    %30 = arith.addi %19, %29 : vector<1x128xi32>
    %31 = arith.select %28, %30, %19 : vector<1x128xi1>, vector<1x128xi32>
    %cst = arith.constant 3.750000e-01 : f32
    %32 = vector.broadcast %cst : f32 to vector<16x128xf32>
    %33 = arith.mulf %32, %9 : vector<16x128xf32>
    %c-2_i32 = arith.constant -2 : i32
    %34 = vector.broadcast %c-2_i32 : i32 to vector<16x1xi32>
    %35 = arith.addi %11, %34 : vector<16x1xi32>
    %c0_i32_13 = arith.constant 0 : i32
    %36 = vector.broadcast %c0_i32_13 : i32 to vector<16x1xi32>
    %37 = arith.cmpi sge, %35, %36 : vector<16x1xi32>
    %c-2_i32_14 = arith.constant -2 : i32
    %38 = vector.broadcast %c-2_i32_14 : i32 to vector<16x1xi32>
    %39 = arith.addi %11, %38 : vector<16x1xi32>
    %c16_i32_15 = arith.constant 16 : i32
    %40 = vector.broadcast %c16_i32_15 : i32 to vector<16x1xi32>
    %41 = arith.cmpi slt, %39, %40 : vector<16x1xi32>
    %42 = arith.andi %37, %41 : vector<16x1xi1>
    %cst_16 = arith.constant 6.250000e-02 : f32
    %cst_17 = arith.constant 0.000000e+00 : f32
    %43 = vector.broadcast %cst_16 : f32 to vector<16x1xf32>
    %44 = vector.broadcast %cst_17 : f32 to vector<16x1xf32>
    %45 = arith.select %42, %43, %44 : vector<16x1xi1>, vector<16x1xf32>
    %c2_i32 = arith.constant 2 : i32
    %46 = tpu.dynamic_rotate %9 by %c2_i32 dim 0 : vector<16x128xf32>, i32 -> vector<16x128xf32>
    %47 = vector.broadcast %45 : vector<16x1xf32> to vector<16x128xf32>
    %48 = arith.mulf %47, %46 : vector<16x128xf32>
    %49 = arith.addf %33, %48 : vector<16x128xf32>
    %c-1_i32 = arith.constant -1 : i32
    %50 = vector.broadcast %c-1_i32 : i32 to vector<16x1xi32>
    %51 = arith.addi %11, %50 : vector<16x1xi32>
    %c0_i32_18 = arith.constant 0 : i32
    %52 = vector.broadcast %c0_i32_18 : i32 to vector<16x1xi32>
    %53 = arith.cmpi sge, %51, %52 : vector<16x1xi32>
    %c-1_i32_19 = arith.constant -1 : i32
    %54 = vector.broadcast %c-1_i32_19 : i32 to vector<16x1xi32>
    %55 = arith.addi %11, %54 : vector<16x1xi32>
    %c16_i32_20 = arith.constant 16 : i32
    %56 = vector.broadcast %c16_i32_20 : i32 to vector<16x1xi32>
    %57 = arith.cmpi slt, %55, %56 : vector<16x1xi32>
    %58 = arith.andi %53, %57 : vector<16x1xi1>
    %cst_21 = arith.constant 2.500000e-01 : f32
    %cst_22 = arith.constant 0.000000e+00 : f32
    %59 = vector.broadcast %cst_21 : f32 to vector<16x1xf32>
    %60 = vector.broadcast %cst_22 : f32 to vector<16x1xf32>
    %61 = arith.select %58, %59, %60 : vector<16x1xi1>, vector<16x1xf32>
    %c1_i32_23 = arith.constant 1 : i32
    %62 = tpu.dynamic_rotate %9 by %c1_i32_23 dim 0 : vector<16x128xf32>, i32 -> vector<16x128xf32>
    %63 = vector.broadcast %61 : vector<16x1xf32> to vector<16x128xf32>
    %64 = arith.mulf %63, %62 : vector<16x128xf32>
    %65 = arith.addf %49, %64 : vector<16x128xf32>
    %c1_i32_24 = arith.constant 1 : i32
    %66 = vector.broadcast %c1_i32_24 : i32 to vector<16x1xi32>
    %67 = arith.addi %11, %66 : vector<16x1xi32>
    %c0_i32_25 = arith.constant 0 : i32
    %68 = vector.broadcast %c0_i32_25 : i32 to vector<16x1xi32>
    %69 = arith.cmpi sge, %67, %68 : vector<16x1xi32>
    %c1_i32_26 = arith.constant 1 : i32
    %70 = vector.broadcast %c1_i32_26 : i32 to vector<16x1xi32>
    %71 = arith.addi %11, %70 : vector<16x1xi32>
    %c16_i32_27 = arith.constant 16 : i32
    %72 = vector.broadcast %c16_i32_27 : i32 to vector<16x1xi32>
    %73 = arith.cmpi slt, %71, %72 : vector<16x1xi32>
    %74 = arith.andi %69, %73 : vector<16x1xi1>
    %cst_28 = arith.constant 2.500000e-01 : f32
    %cst_29 = arith.constant 0.000000e+00 : f32
    %75 = vector.broadcast %cst_28 : f32 to vector<16x1xf32>
    %76 = vector.broadcast %cst_29 : f32 to vector<16x1xf32>
    %77 = arith.select %74, %75, %76 : vector<16x1xi1>, vector<16x1xf32>
    %c15_i32 = arith.constant 15 : i32
    %78 = tpu.dynamic_rotate %9 by %c15_i32 dim 0 : vector<16x128xf32>, i32 -> vector<16x128xf32>
    %79 = vector.broadcast %77 : vector<16x1xf32> to vector<16x128xf32>
    %80 = arith.mulf %79, %78 : vector<16x128xf32>
    %81 = arith.addf %65, %80 : vector<16x128xf32>
    %c2_i32_30 = arith.constant 2 : i32
    %82 = vector.broadcast %c2_i32_30 : i32 to vector<16x1xi32>
    %83 = arith.addi %11, %82 : vector<16x1xi32>
    %c0_i32_31 = arith.constant 0 : i32
    %84 = vector.broadcast %c0_i32_31 : i32 to vector<16x1xi32>
    %85 = arith.cmpi sge, %83, %84 : vector<16x1xi32>
    %c2_i32_32 = arith.constant 2 : i32
    %86 = vector.broadcast %c2_i32_32 : i32 to vector<16x1xi32>
    %87 = arith.addi %11, %86 : vector<16x1xi32>
    %c16_i32_33 = arith.constant 16 : i32
    %88 = vector.broadcast %c16_i32_33 : i32 to vector<16x1xi32>
    %89 = arith.cmpi slt, %87, %88 : vector<16x1xi32>
    %90 = arith.andi %85, %89 : vector<16x1xi1>
    %cst_34 = arith.constant 6.250000e-02 : f32
    %cst_35 = arith.constant 0.000000e+00 : f32
    %91 = vector.broadcast %cst_34 : f32 to vector<16x1xf32>
    %92 = vector.broadcast %cst_35 : f32 to vector<16x1xf32>
    %93 = arith.select %90, %91, %92 : vector<16x1xi1>, vector<16x1xf32>
    %c14_i32 = arith.constant 14 : i32
    %94 = tpu.dynamic_rotate %9 by %c14_i32 dim 0 : vector<16x128xf32>, i32 -> vector<16x128xf32>
    %95 = vector.broadcast %93 : vector<16x1xf32> to vector<16x128xf32>
    %96 = arith.mulf %95, %94 : vector<16x128xf32>
    %97 = arith.addf %81, %96 : vector<16x128xf32>
    %cst_36 = arith.constant 3.750000e-01 : f32
    %98 = vector.broadcast %cst_36 : f32 to vector<16x128xf32>
    %99 = arith.mulf %98, %97 : vector<16x128xf32>
    %c-2_i32_37 = arith.constant -2 : i32
    %100 = vector.broadcast %c-2_i32_37 : i32 to vector<1x128xi32>
    %101 = arith.addi %31, %100 : vector<1x128xi32>
    %c0_i32_38 = arith.constant 0 : i32
    %102 = vector.broadcast %c0_i32_38 : i32 to vector<1x128xi32>
    %103 = arith.cmpi sge, %101, %102 : vector<1x128xi32>
    %c-2_i32_39 = arith.constant -2 : i32
    %104 = vector.broadcast %c-2_i32_39 : i32 to vector<1x128xi32>
    %105 = arith.addi %31, %104 : vector<1x128xi32>
    %c16_i32_40 = arith.constant 16 : i32
    %106 = vector.broadcast %c16_i32_40 : i32 to vector<1x128xi32>
    %107 = arith.cmpi slt, %105, %106 : vector<1x128xi32>
    %108 = arith.andi %103, %107 : vector<1x128xi1>
    %cst_41 = arith.constant 6.250000e-02 : f32
    %cst_42 = arith.constant 0.000000e+00 : f32
    %109 = vector.broadcast %cst_41 : f32 to vector<1x128xf32>
    %110 = vector.broadcast %cst_42 : f32 to vector<1x128xf32>
    %111 = arith.select %108, %109, %110 : vector<1x128xi1>, vector<1x128xf32>
    %c2_i32_43 = arith.constant 2 : i32
    %112 = tpu.dynamic_rotate %97 by %c2_i32_43 dim 1 : vector<16x128xf32>, i32 -> vector<16x128xf32>
    %113 = vector.broadcast %111 : vector<1x128xf32> to vector<16x128xf32>
    %114 = arith.mulf %113, %112 : vector<16x128xf32>
    %115 = arith.addf %99, %114 : vector<16x128xf32>
    %c-1_i32_44 = arith.constant -1 : i32
    %116 = vector.broadcast %c-1_i32_44 : i32 to vector<1x128xi32>
    %117 = arith.addi %31, %116 : vector<1x128xi32>
    %c0_i32_45 = arith.constant 0 : i32
    %118 = vector.broadcast %c0_i32_45 : i32 to vector<1x128xi32>
    %119 = arith.cmpi sge, %117, %118 : vector<1x128xi32>
    %c-1_i32_46 = arith.constant -1 : i32
    %120 = vector.broadcast %c-1_i32_46 : i32 to vector<1x128xi32>
    %121 = arith.addi %31, %120 : vector<1x128xi32>
    %c16_i32_47 = arith.constant 16 : i32
    %122 = vector.broadcast %c16_i32_47 : i32 to vector<1x128xi32>
    %123 = arith.cmpi slt, %121, %122 : vector<1x128xi32>
    %124 = arith.andi %119, %123 : vector<1x128xi1>
    %cst_48 = arith.constant 2.500000e-01 : f32
    %cst_49 = arith.constant 0.000000e+00 : f32
    %125 = vector.broadcast %cst_48 : f32 to vector<1x128xf32>
    %126 = vector.broadcast %cst_49 : f32 to vector<1x128xf32>
    %127 = arith.select %124, %125, %126 : vector<1x128xi1>, vector<1x128xf32>
    %c1_i32_50 = arith.constant 1 : i32
    %128 = tpu.dynamic_rotate %97 by %c1_i32_50 dim 1 : vector<16x128xf32>, i32 -> vector<16x128xf32>
    %129 = vector.broadcast %127 : vector<1x128xf32> to vector<16x128xf32>
    %130 = arith.mulf %129, %128 : vector<16x128xf32>
    %131 = arith.addf %115, %130 : vector<16x128xf32>
    %c1_i32_51 = arith.constant 1 : i32
    %132 = vector.broadcast %c1_i32_51 : i32 to vector<1x128xi32>
    %133 = arith.addi %31, %132 : vector<1x128xi32>
    %c0_i32_52 = arith.constant 0 : i32
    %134 = vector.broadcast %c0_i32_52 : i32 to vector<1x128xi32>
    %135 = arith.cmpi sge, %133, %134 : vector<1x128xi32>
    %c1_i32_53 = arith.constant 1 : i32
    %136 = vector.broadcast %c1_i32_53 : i32 to vector<1x128xi32>
    %137 = arith.addi %31, %136 : vector<1x128xi32>
    %c16_i32_54 = arith.constant 16 : i32
    %138 = vector.broadcast %c16_i32_54 : i32 to vector<1x128xi32>
    %139 = arith.cmpi slt, %137, %138 : vector<1x128xi32>
    %140 = arith.andi %135, %139 : vector<1x128xi1>
    %cst_55 = arith.constant 2.500000e-01 : f32
    %cst_56 = arith.constant 0.000000e+00 : f32
    %141 = vector.broadcast %cst_55 : f32 to vector<1x128xf32>
    %142 = vector.broadcast %cst_56 : f32 to vector<1x128xf32>
    %143 = arith.select %140, %141, %142 : vector<1x128xi1>, vector<1x128xf32>
    %c127_i32 = arith.constant 127 : i32
    %144 = tpu.dynamic_rotate %97 by %c127_i32 dim 1 : vector<16x128xf32>, i32 -> vector<16x128xf32>
    %145 = vector.broadcast %143 : vector<1x128xf32> to vector<16x128xf32>
    %146 = arith.mulf %145, %144 : vector<16x128xf32>
    %147 = arith.addf %131, %146 : vector<16x128xf32>
    %c2_i32_57 = arith.constant 2 : i32
    %148 = vector.broadcast %c2_i32_57 : i32 to vector<1x128xi32>
    %149 = arith.addi %31, %148 : vector<1x128xi32>
    %c0_i32_58 = arith.constant 0 : i32
    %150 = vector.broadcast %c0_i32_58 : i32 to vector<1x128xi32>
    %151 = arith.cmpi sge, %149, %150 : vector<1x128xi32>
    %c2_i32_59 = arith.constant 2 : i32
    %152 = vector.broadcast %c2_i32_59 : i32 to vector<1x128xi32>
    %153 = arith.addi %31, %152 : vector<1x128xi32>
    %c16_i32_60 = arith.constant 16 : i32
    %154 = vector.broadcast %c16_i32_60 : i32 to vector<1x128xi32>
    %155 = arith.cmpi slt, %153, %154 : vector<1x128xi32>
    %156 = arith.andi %151, %155 : vector<1x128xi1>
    %cst_61 = arith.constant 6.250000e-02 : f32
    %cst_62 = arith.constant 0.000000e+00 : f32
    %157 = vector.broadcast %cst_61 : f32 to vector<1x128xf32>
    %158 = vector.broadcast %cst_62 : f32 to vector<1x128xf32>
    %159 = arith.select %156, %157, %158 : vector<1x128xi1>, vector<1x128xf32>
    %c126_i32 = arith.constant 126 : i32
    %160 = tpu.dynamic_rotate %97 by %c126_i32 dim 1 : vector<16x128xf32>, i32 -> vector<16x128xf32>
    %161 = vector.broadcast %159 : vector<1x128xf32> to vector<16x128xf32>
    %162 = arith.mulf %161, %160 : vector<16x128xf32>
    %163 = arith.addf %147, %162 : vector<16x128xf32>
    %164 = arith.subf %10, %9 : vector<16x128xf32>
    %cst_63 = arith.constant 0.000000e+00 : f32
    %165 = vector.broadcast %cst_63 : f32 to vector<16x128xf32>
    %166 = arith.maximumf %164, %165 : vector<16x128xf32>
    %167 = math.absf %164 : vector<16x128xf32>
    %cst_64 = arith.constant 0.000000e+00 : f32
    %168 = vector.broadcast %cst_64 : f32 to vector<16x128xf32>
    %169 = arith.subf %168, %167 : vector<16x128xf32>
    %170 = math.exp %169 : vector<16x128xf32>
    %cst_65 = arith.constant 1.000000e+00 : f32
    %171 = vector.broadcast %cst_65 : f32 to vector<16x128xf32>
    %172 = arith.addf %171, %170 : vector<16x128xf32>
    %173 = math.log %172 : vector<16x128xf32>
    %174 = arith.addf %166, %173 : vector<16x128xf32>
    %cst_66 = arith.constant 0.000000e+00 : f32
    %175 = vector.broadcast %cst_66 : f32 to vector<16x128xf32>
    %176 = arith.subf %175, %174 : vector<16x128xf32>
    %cst_67 = arith.constant 7.500000e-01 : f32
    %cst_68 = arith.constant 2.500000e-01 : f32
    %177 = vector.broadcast %cst_67 : f32 to vector<16x128xf32>
    %178 = vector.broadcast %cst_68 : f32 to vector<16x128xf32>
    %179 = arith.select %8, %177, %178 : vector<16x128xi1>, vector<16x128xf32>
    %cst_69 = arith.constant 1.000000e+00 : f32
    %180 = vector.broadcast %cst_69 : f32 to vector<16x128xf32>
    %181 = arith.subf %180, %163 : vector<16x128xf32>
    %182 = arith.mulf %181, %181 : vector<16x128xf32>
    %cst_70 = arith.constant 0.000000e+00 : f32
    %183 = vector.broadcast %cst_70 : f32 to vector<16x128xf32>
    %184 = arith.subf %183, %182 : vector<16x128xf32>
    %185 = arith.mulf %176, %179 : vector<16x128xf32>
    %186 = arith.mulf %184, %185 : vector<16x128xf32>
    %c16_i32_71 = arith.constant 16 : i32
    %187 = vector.broadcast %c16_i32_71 : i32 to vector<16x1xi32>
    %188 = arith.cmpi slt, %11, %187 : vector<16x1xi32>
    %c32_i32 = arith.constant 32 : i32
    %189 = vector.broadcast %c32_i32 : i32 to vector<1x128xi32>
    %190 = arith.cmpi slt, %15, %189 : vector<1x128xi32>
    %191 = vector.broadcast %188 : vector<16x1xi1> to vector<16x128xi1>
    %192 = vector.broadcast %190 : vector<1x128xi1> to vector<16x128xi1>
    %193 = arith.andi %191, %192 : vector<16x128xi1>
    %cst_72 = arith.constant 0.000000e+00 : f32
    %194 = vector.broadcast %cst_72 : f32 to vector<16x128xf32>
    %195 = arith.select %193, %186, %194 : vector<16x128xi1>, vector<16x128xf32>
    %196 = vector.shape_cast %195 : vector<16x128xf32> to vector<1x16x128xf32>
    %cst_73 = arith.constant dense<0.000000e+00> : vector<1xf32>
    %197 = vector.multi_reduction <add>, %196, %cst_73 [1, 2] : vector<1x16x128xf32> to vector<1xf32>
    %198 = vector.shape_cast %197 : vector<1xf32> to vector<1x1x1xf32>
    %199 = vector.extract %198[0, 0, 0] : f32 from vector<1x1x1xf32>
    %200 = vector.broadcast %199 : f32 to vector<1x1x128xf32>
    %c0_74 = arith.constant 0 : index
    %c0_75 = arith.constant 0 : index
    %c0_76 = arith.constant 0 : index
    %201 = vector.load %arg3[%c0_74, %c0_75, %c0_76] : memref<1x1x128xf32, #tpu.memory_space<vmem>>, vector<1x1x128xf32>
    tpu.vector_store %arg3[%c0_74, %c0_75, %c0_76], %200 {strides = array<i32>} : memref<1x1x128xf32, #tpu.memory_space<vmem>>, vector<1x1x128xf32>,
    return
  }
  func.func @transform_0(%arg0: i32) -> (i32, i32, i32) {
    %c0_i32 = arith.constant 0 : i32
    %c0_i32_0 = arith.constant 0 : i32
    %c0_i32_1 = arith.constant 0 : i32
    return %c0_i32, %c0_i32_0, %arg0 : i32, i32, i32
  }
  func.func @transform_1(%arg0: i32) -> (i32, i32, i32) {
    %c0_i32 = arith.constant 0 : i32
    %c0_i32_0 = arith.constant 0 : i32
    %c0_i32_1 = arith.constant 0 : i32
    return %c0_i32, %c0_i32_0, %arg0 : i32, i32, i32
  }
  func.func @transform_2(%arg0: i32) -> (i32, i32, i32) {
    %c0_i32 = arith.constant 0 : i32
    %c0_i32_0 = arith.constant 0 : i32
    %c0_i32_1 = arith.constant 0 : i32
    return %arg0, %c0_i32, %c0_i32_0 : i32, i32, i32
  }
}

</mosaic_0001>

<llo_original>
// kernel: tpu_custom_call.1
$region0: #{tpu_custom_call.1}
  #allocation0 [shape = 'u32[]', space=smem, size = 0x4, offset = 0x4, fixed_abs, tag = 'smem constant byte address 0x4 - core index']
  #allocation1 [shape = 'u32[144,128]{1,0:T(1,128)}', space=vmem, size = 0x12000, scoped, tag = 'internal scratch']
  %s0 = inlined_call_operand.hbm [shape: f32[2,16,128], index: 0, kind: input, shape index: {}]
  %s1 = inlined_call_operand.hbm [shape: f32[2,16,128], index: 1, kind: input, shape index: {}]
  %s2 = inlined_call_operand.hbm [shape: f32[1,1,128], index: 2, kind: output, shape index: {}]
  %s3 = sld [smem:[#allocation0]]
  $region26: #{tpu_custom_call.1} parent=0
    _
  %s5 = ssub.s32 1, %s3
  %s6 = scalar_select 0, %s5, %s3
  $region1: #{tpu_custom_call.1} parent=0
    #allocation2 [shape = 'u8[16384]{0}', space=vmem, size = 0x4000, scoped, tag = 'input window, operand 0, single buffered']
    #allocation3 [shape = 's32[1]{0}', space=sflag, size = 0x4, scoped, tag = 'scoped memory for tpu_custom_call.1']
    #allocation4 [shape = 's32[1]{0}', space=sflag, size = 0x4, scoped, tag = 'scoped memory for tpu_custom_call.1']
    #allocation5 [shape = 'u8[16384]{0}', space=vmem, size = 0x4000, scoped, tag = 'input window, operand 1, single buffered']
    #allocation6 [shape = 's32[1]{0}', space=sflag, size = 0x4, scoped, tag = 'scoped memory for tpu_custom_call.1']
    #allocation7 [shape = 'u8[512]{0}', space=vmem, size = 0x400, scoped, tag = 'output window, operand 0, single buffered']
    %7 = vsyncpa [#allocation3], 0
    %8 = vsyncpa [#allocation6], 0
    %9 = vsyncpa [#allocation4], 0
    // Predicated region
    $region2: #{tpu_custom_call.1} parent=1 // pred_check
      _
    $region3: #{tpu_custom_call.1} parent=1 // pred_check_branch
      %11 = sbr.rel (0) target = $region5
    $region4: #{tpu_custom_call.1} parent=1 // pred_region
      %s13 = ssub.s32 512, 512
      %14 = vsyncadd [#allocation3], %s13
      %s15 = sshll.u32 [#allocation2], 4
      %s16 = int_to_ptr.vmem [resolvable:$true] %s15
      %21 = dma.hbm_to_vmem [thread:$0]  %s0, 512, %s16, [#allocation3], 128, 128, 8
    $region5: #{tpu_custom_call.1} parent=1 // pred_fallthru
      _
    // Predicated region
    $region6: #{tpu_custom_call.1} parent=1 // pred_check
      _
    $region7: #{tpu_custom_call.1} parent=1 // pred_check_branch
      %23 = sbr.rel (0) target = $region9
    $region8: #{tpu_custom_call.1} parent=1 // pred_region
      %s25 = ssub.s32 512, 512
      %26 = vsyncadd [#allocation6], %s25
      %s27 = sshll.u32 [#allocation5], 4
      %s28 = int_to_ptr.vmem [resolvable:$true] %s27
      %33 = dma.hbm_to_vmem [thread:$0]  %s1, 512, %s28, [#allocation6], 128, 128, 8
    $region9: #{tpu_custom_call.1} parent=1 // pred_fallthru
      _
    // Predicated region
    $region10: #{tpu_custom_call.1} parent=1 // pred_check
      _
    $region11: #{tpu_custom_call.1} parent=1 // pred_check_branch
      %35 = sbr.rel (0) target = $region13
    $region12: #{tpu_custom_call.1} parent=1 // pred_region
      %36 = dma.done [#allocation3], 512
    $region13: #{tpu_custom_call.1} parent=1 // pred_fallthru
      _
    // Predicated region
    $region14: #{tpu_custom_call.1} parent=1 // pred_check
      _
    $region15: #{tpu_custom_call.1} parent=1 // pred_check_branch
      %38 = sbr.rel (0) target = $region17
    $region16: #{tpu_custom_call.1} parent=1 // pred_region
      %39 = dma.done [#allocation6], 512
    $region17: #{tpu_custom_call.1} parent=1 // pred_fallthru
      _
    %v40 = vld [vmem:[#allocation2] sm:$0xff]
    %v41 = vld [vmem:[#allocation2 + $0x8] sm:$0xff]
    %s42 = scalar_lea.vmem [#allocation2], 16
    %v43 = vld [vmem:[%s42] sm:$0xff]
    %v44 = vld [vmem:[%s42 + $0x8] sm:$0xff]
    %v45 = vld [vmem:[#allocation5] sm:$0xff]
    %v46 = vld [vmem:[#allocation5 + $0x8] sm:$0xff]
    %s47 = scalar_lea.vmem [#allocation5], 16
    %v48 = vld [vmem:[%s47] sm:$0xff]
    %v49 = vld [vmem:[%s47 + $0x8] sm:$0xff]
    %vm50 = vcmp.gt.f32.partialorder %v48, %v45
    %vm51 = vcmp.gt.f32.partialorder %v49, %v46
    %v52 = vsel %vm50, %v43, %v40
    %v53 = vsel %vm51, %v44, %v41
    %v54 = vsel %vm50, %v40, %v43
    %v55 = vsel %vm51, %v41, %v44
    %v56 = vlaneseq
    %v57 = vshrl.u32 %v56, 7
    %v58 = vadd.s32 %v57, 8
    %v59 = vlaneseq
    %v60 = vand.u32 %v59, 127
    %s61 = smul.u32 0, 128
    %v62 = vstv %s61
    %v63 = vadd.s32 %v60, %v62
    %vm64 = vcmp.lt.s32.totalorder %v63, 0
    %v65 = vsub.s32 0, %v63
    %v66 = vsel %vm64, %v65, %v63
    %v67 = vshrl.u32 %v66, 4
    %v68 = vand.u32 %v66, 15
    %v69 = vsub.s32 0, %v68
    %v70 = vsel %vm64, %v69, %v68
    %vm71 = vcmp.ne.s32.totalorder %v70, 0
    %vm72 = vcmp.lt.s32.totalorder %v70, 0
    %vm73 = vmand %vm72, %vm71
    %v74 = vadd.s32 %v70, 16
    %v75 = vsel %vm73, %v74, %v70
    %v76 = vmul.f32 %v52, 0.375
    %v77 = vmul.f32 %v53, 0.375
    %v78 = vadd.s32 %v57, 4294967294
    %v79 = vadd.s32 %v58, 4294967294
    %vm80 = vcmp.ge.s32.totalorder %v78, 0
    %vm81 = vcmp.ge.s32.totalorder %v79, 0
    %vm82 = vcmp.lt.s32.totalorder %v78, 16
    %vm83 = vcmp.lt.s32.totalorder %v79, 16
    %vm84 = vmand %vm80, %vm82
    %vm85 = vmand %vm81, %vm83
    %v86 = vsel %vm84, 0.0625, 0.0
    %v87 = vsel %vm85, 0.0625, 0.0
    %v88 = vrot.slane %v52, 6
    %v89 = vrot.slane %v53, 6
    %vm90 = vcmp.lt.s32.totalorder %v57, 2
    %v91 = vsel %vm90, %v88, %v89
    %v92 = vsel %vm90, %v89, %v88
    %v93 = vmul.f32 %v86, %v92
    %v94 = vmul.f32 %v87, %v91
    %v95 = vadd.f32 %v76, %v93
    %v96 = vadd.f32 %v77, %v94
    %v97 = vadd.s32 %v57, 4294967295
    %v98 = vadd.s32 %v58, 4294967295
    %vm99 = vcmp.ge.s32.totalorder %v97, 0
    %vm100 = vcmp.ge.s32.totalorder %v98, 0
    %vm101 = vcmp.lt.s32.totalorder %v97, 16
    %vm102 = vcmp.lt.s32.totalorder %v98, 16
    %vm103 = vmand %vm99, %vm101
    %vm104 = vmand %vm100, %vm102
    %v105 = vsel %vm103, 0.25, 0.0
    %v106 = vsel %vm104, 0.25, 0.0
    %v107 = vrot.slane %v52, 7
    %v108 = vrot.slane %v53, 7
    %vm109 = vcmp.lt.s32.totalorder %v57, 1
    %v110 = vsel %vm109, %v107, %v108
    %v111 = vsel %vm109, %v108, %v107
    %v112 = vmul.f32 %v105, %v111
    %v113 = vmul.f32 %v106, %v110
    %v114 = vadd.f32 %v95, %v112
    %v115 = vadd.f32 %v96, %v113
    %v116 = vadd.s32 %v57, 1
    %v117 = vadd.s32 %v58, 1
    %vm118 = vcmp.ge.s32.totalorder %v116, 0
    %vm119 = vcmp.ge.s32.totalorder %v117, 0
    %vm120 = vcmp.lt.s32.totalorder %v116, 16
    %vm121 = vcmp.lt.s32.totalorder %v117, 16
    %vm122 = vmand %vm118, %vm120
    %vm123 = vmand %vm119, %vm121
    %v124 = vsel %vm122, 0.25, 0.0
    %v125 = vsel %vm123, 0.25, 0.0
    %v126 = vrot.slane %v52, 1
    %v127 = vrot.slane %v53, 1
    %vm128 = vcmp.lt.s32.totalorder %v57, 7
    %v129 = vsel %vm128, %v126, %v127
    %v130 = vsel %vm128, %v127, %v126
    %v131 = vmul.f32 %v124, %v129
    %v132 = vmul.f32 %v125, %v130
    %v133 = vadd.f32 %v114, %v131
    %v134 = vadd.f32 %v115, %v132
    %v135 = vadd.s32 %v57, 2
    %v136 = vadd.s32 %v58, 2
    %vm137 = vcmp.ge.s32.totalorder %v135, 0
    %vm138 = vcmp.ge.s32.totalorder %v136, 0
    %vm139 = vcmp.lt.s32.totalorder %v135, 16
    %vm140 = vcmp.lt.s32.totalorder %v136, 16
    %vm141 = vmand %vm137, %vm139
    %vm142 = vmand %vm138, %vm140
    %v143 = vsel %vm141, 0.0625, 0.0
    %v144 = vsel %vm142, 0.0625, 0.0
    %v145 = vrot.slane %v52, 2
    %v146 = vrot.slane %v53, 2
    %vm147 = vcmp.lt.s32.totalorder %v57, 6
    %v148 = vsel %vm147, %v145, %v146
    %v149 = vsel %vm147, %v146, %v145
    %v150 = vmul.f32 %v143, %v148
    %v151 = vmul.f32 %v144, %v149
    %v152 = vadd.f32 %v133, %v150
    %v153 = vadd.f32 %v134, %v151
    %v154 = vmul.f32 %v152, 0.375
    %v155 = vmul.f32 %v153, 0.375
    %v156 = vadd.s32 %v75, 4294967294
    %vm157 = vcmp.ge.s32.totalorder %v156, 0
    %vm158 = vcmp.lt.s32.totalorder %v156, 16
    %vm159 = vmand %vm157, %vm158
    %v160 = vsel %vm159, 0.0625, 0.0
    %161 = vrot.lane.b32.xlu0 %v152, 2
    %v162 = vpop.permute.xlu0 %161
    %163 = vrot.lane.b32.xlu0 %v153, 2
    %v164 = vpop.permute.xlu0 %163
    %v165 = vmul.f32 %v160, %v162
    %v166 = vmul.f32 %v160, %v164
    %v167 = vadd.f32 %v154, %v165
    %v168 = vadd.f32 %v155, %v166
    %v169 = vadd.s32 %v75, 4294967295
    %vm170 = vcmp.ge.s32.totalorder %v169, 0
    %vm171 = vcmp.lt.s32.totalorder %v169, 16
    %vm172 = vmand %vm170, %vm171
    %v173 = vsel %vm172, 0.25, 0.0
    %174 = vrot.lane.b32.xlu0 %v152, 1
    %v175 = vpop.permute.xlu0 %174
    %176 = vrot.lane.b32.xlu0 %v153, 1
    %v177 = vpop.permute.xlu0 %176
    %v178 = vmul.f32 %v173, %v175
    %v179 = vmul.f32 %v173, %v177
    %v180 = vadd.f32 %v167, %v178
    %v181 = vadd.f32 %v168, %v179
    %v182 = vadd.s32 %v75, 1
    %vm183 = vcmp.ge.s32.totalorder %v182, 0
    %vm184 = vcmp.lt.s32.totalorder %v182, 16
    %vm185 = vmand %vm183, %vm184
    %v186 = vsel %vm185, 0.25, 0.0
    %187 = vrot.lane.b32.xlu0 %v152, 127
    %v188 = vpop.permute.xlu0 %187
    %189 = vrot.lane.b32.xlu0 %v153, 127
    %v190 = vpop.permute.xlu0 %189
    %v191 = vmul.f32 %v186, %v188
    %v192 = vmul.f32 %v186, %v190
    %v193 = vadd.f32 %v180, %v191
    %v194 = vadd.f32 %v181, %v192
    %v195 = vadd.s32 %v75, 2
    %vm196 = vcmp.ge.s32.totalorder %v195, 0
    %vm197 = vcmp.lt.s32.totalorder %v195, 16
    %vm198 = vmand %vm196, %vm197
    %v199 = vsel %vm198, 0.0625, 0.0
    %200 = vrot.lane.b32.xlu0 %v152, 126
    %v201 = vpop.permute.xlu0 %200
    %202 = vrot.lane.b32.xlu0 %v153, 126
    %v203 = vpop.permute.xlu0 %202
    %v204 = vmul.f32 %v199, %v201
    %v205 = vmul.f32 %v199, %v203
    %v206 = vadd.f32 %v193, %v204
    %v207 = vadd.f32 %v194, %v205
    %v208 = vsub.f32 %v54, %v52
    %v209 = vsub.f32 %v55, %v53
    %v210 = vmax.f32 %v208, 0.0
    %v211 = vmax.f32 %v209, 0.0
    %v212 = vand.u32 2147483647, %v208
    %v213 = vand.u32 2147483647, %v209
    %v214 = vsub.f32 0.0, %v212
    %v215 = vsub.f32 0.0, %v213
    %v216 = vmul.f32 %v214, 1.442695
    %v217 = vpow.pop %v216
    %v218 = vmul.f32 %v215, 1.442695
    %v219 = vpow.pop %v218
    %v220 = vadd.f32 %v217, 1.0
    %v221 = vadd.f32 %v219, 1.0
    %v222 = vlog2.pop %v220
    %v223 = vmul.f32 %v222, 0.6931472
    %v224 = vlog2.pop %v221
    %v225 = vmul.f32 %v224, 0.6931472
    %v226 = vadd.f32 %v210, %v223
    %v227 = vadd.f32 %v211, %v225
    %v228 = vsub.f32 0.0, %v226
    %v229 = vsub.f32 0.0, %v227
    %v230 = vsel %vm50, 0.75, 0.25
    %v231 = vsel %vm51, 0.75, 0.25
    %v232 = vsub.f32 1.0, %v206
    %v233 = vsub.f32 1.0, %v207
    %v234 = vmul.f32 %v232, %v232
    %v235 = vmul.f32 %v233, %v233
    %v236 = vsub.f32 0.0, %v234
    %v237 = vsub.f32 0.0, %v235
    %v238 = vmul.f32 %v228, %v230
    %v239 = vmul.f32 %v229, %v231
    %v240 = vmul.f32 %v236, %v238
    %v241 = vmul.f32 %v237, %v239
    %vm242 = vcmp.lt.s32.totalorder %v57, 16
    %vm243 = vcmp.lt.s32.totalorder %v58, 16
    %vm244 = vcmp.lt.s32.totalorder %v63, 32
    %v245 = vsel %vm242, 1, 0
    %v246 = vsel %vm243, 1, 0
    %vm247 = vcmp.eq.s32.totalorder %v245, 1
    %vm248 = vcmp.eq.s32.totalorder %v246, 1
    %v249 = vsel %vm244, 1, 0
    %vm250 = vcmp.eq.s32.totalorder %v249, 1
    %vm251 = vmand %vm247, %vm250
    %vm252 = vmand %vm248, %vm250
    %v253 = vsel %vm251, %v240, 0.0
    %v254 = vsel %vm252, %v241, 0.0
    %v255 = vadd.f32 %v253, %v254
    %256 = vadd.xlane.f32.xlu0 %v255
    %v257 = vpop.xlane.xlu0 %256
    %v258 = vrot.slane %v257, 4
    %v259 = vadd.f32 %v257, %v258
    %v260 = vrot.slane %v259, 2
    %v261 = vadd.f32 %v259, %v260
    %v262 = vrot.slane %v261, 1
    %v263 = vadd.f32 %v261, %v262
    %s264 = vtos %v263
    %v265 = vstv %s264
    %266 = vst [vmem:[#allocation7] sm:$0x1] %v265
    // Predicated region
    $region18: #{tpu_custom_call.1} parent=1 // pred_check
      _
    $region19: #{tpu_custom_call.1} parent=1 // pred_check_branch
      %268 = sbr.rel (0) target = $region21
    $region20: #{tpu_custom_call.1} parent=1 // pred_region
      %s270 = ssub.s32 16, 16
      %271 = vsyncadd [#allocation4], %s270
      %s273 = sshll.u32 [#allocation7], 4
      %s274 = int_to_ptr.vmem [resolvable:$true] %s273
      %276 = dma.vmem_to_hbm [thread:$0]  %s274, 16, %s2, [#allocation4]
    $region21: #{tpu_custom_call.1} parent=1 // pred_fallthru
      _
    // Predicated region
    $region22: #{tpu_custom_call.1} parent=1 // pred_check
      _
    $region23: #{tpu_custom_call.1} parent=1 // pred_check_branch
      %278 = sbr.rel (0) target = $region25
    $region24: #{tpu_custom_call.1} parent=1 // pred_region
      %279 = dma.done [#allocation4], 16
    $region25: #{tpu_custom_call.1} parent=1 // pred_fallthru
      _
    %280 = vsyncpa [#allocation3], 1
    %281 = vsyncpa [#allocation6], 1
    %282 = vsyncpa [#allocation4], 1

</llo_original>
